<compile_context>
chip_gen: v7x
topology: tpu7x:2x2x1
jax: 0.10.0
libtpu: 0.0.40
codegen_flags: <defaults>
</compile_context>

<pallas_src>
import functools

import jax
import jax.numpy as jnp
from jax.experimental import pallas as pl
from jax.experimental.pallas import tpu as pltpu


def _default_block_bytes():
    """f32 working-set bytes per block: bigger on v6e/v7x (32 MiB scoped-VMEM
    default + faster HBM), conservative elsewhere (v5e default is 16 MiB)."""
    try:
        kind = jax.devices()[0].device_kind.lower()
    except Exception:
        kind = ""
    if "v6" in kind or "v7" in kind:
        return 4 << 20
    return 2 << 20


def _sublane_multiple(itemsize):
    # Sub-32-bit dtypes pack along sublanes: bf16 rows travel in pairs, int8
    # in quads -> keep row tiles aligned to the packed sublane count.
    return {4: 8, 2: 16, 1: 32}.get(itemsize, 8)


def _choose_tiles(rows, cols, itemsize, budget_elems):
    """Pick (tile_r, tile_c): lane-dense, sublane-aligned, ~budget elements."""
    sub = _sublane_multiple(itemsize)
    if rows * cols <= budget_elems:
        return rows, cols                       # single full-dim block (legal)
    if sub * cols <= budget_elems:              # tile rows, keep full H*W lanes
        tile_r = (budget_elems // cols) // sub * sub
        return min(tile_r, rows), cols
    # Thin-tall tensors (huge H*W): tile the lane axis too (128-multiples).
    tile_c = max(128, (budget_elems // sub) // 128 * 128)
    return min(sub, rows), min(tile_c, cols)


def _stats_kernel(x_ref, psum_ref, psq_ref, *, tile_r, tile_c, rows, cols,
                  ragged_r, ragged_c):
    """Per-row-block partial sum(x) / sum(x*x), accumulated across columns."""
    i = pl.program_id(0)
    j = pl.program_id(1)

    @pl.when(j == 0)
    def _init():
        psum_ref[...] = jnp.zeros_like(psum_ref)
        psq_ref[...] = jnp.zeros_like(psq_ref)

    x = x_ref[...].astype(jnp.float32)          # native-dtype DMA, cast here

    def _accumulate(xv):
        # (1, 1) scalar broadcast-added onto the resident (8, 128) partials.
        psum_ref[...] += jnp.sum(xv, keepdims=True)
        psq_ref[...] += jnp.sum(xv * xv, keepdims=True)

    if not (ragged_r or ragged_c):
        _accumulate(x)
        return

    # Only edge blocks pay for the iota + select; interior blocks stay clean.
    edge = jnp.bool_(False)
    if ragged_r:
        edge = jnp.logical_or(edge, i == pl.num_programs(0) - 1)
    if ragged_c:
        edge = jnp.logical_or(edge, j == pl.num_programs(1) - 1)

    @pl.when(edge)
    def _masked():
        xm = x
        if ragged_r:
            rid = jax.lax.broadcasted_iota(jnp.int32, x.shape, 0) + i * tile_r
            xm = jnp.where(rid < rows, xm, 0.0)
        if ragged_c:
            cid = jax.lax.broadcasted_iota(jnp.int32, x.shape, 1) + j * tile_c
            xm = jnp.where(cid < cols, xm, 0.0)
        _accumulate(xm)

    @pl.when(jnp.logical_not(edge))
    def _plain():
        _accumulate(x)


def _apply_kernel(x_ref, cn_ref, nl_ref, o_ref, *, tile_r):
    """o = x + channel_noise * noise_level (f32 math, native-dtype in/out)."""
    i = pl.program_id(0)
    nl = nl_ref[0, 0]                                       # SMEM scalar
    r0 = pl.multiple_of(i * tile_r, tile_r)
    cn = cn_ref[pl.ds(r0, tile_r), :]                       # (tile_r, 1) f32
    x = x_ref[...].astype(jnp.float32)
    o_ref[...] = (x + cn * nl).astype(o_ref.dtype)


def channel_noise(x, channel_noise_vec, std_noise=0.1, target_block_bytes=None):
    """x: (N, C, H, W) float tensor; channel_noise_vec: (C,) uniform [0, 1)."""
    N, C, H, W = x.shape
    rows, cols = N * C, H * W
    n = rows * cols
    itemsize = jnp.dtype(x.dtype).itemsize

    if target_block_bytes is None:
        target_block_bytes = _default_block_bytes()
    budget_elems = max(8 * 128, target_block_bytes // 4)    # f32 elems / block

    tile_r, tile_c = _choose_tiles(rows, cols, itemsize, budget_elems)
    grid_r = pl.cdiv(rows, tile_r)
    grid_c = pl.cdiv(cols, tile_c)
    ragged_r = (rows % tile_r) != 0
    ragged_c = (cols % tile_c) != 0

    x2 = x.reshape(rows, cols)                  # native dtype, layout-only

    # ---- Pass 1: tiled global sum / sum-of-squares (per-row-block partials) --
    psum, psq = pl.pallas_call(
        functools.partial(_stats_kernel, tile_r=tile_r, tile_c=tile_c,
                          rows=rows, cols=cols,
                          ragged_r=ragged_r, ragged_c=ragged_c),
        out_shape=(jax.ShapeDtypeStruct((grid_r * 8, 128), jnp.float32),
                   jax.ShapeDtypeStruct((grid_r * 8, 128), jnp.float32)),
        grid=(grid_r, grid_c),
        in_specs=[pl.BlockSpec((tile_r, tile_c), lambda i, j: (i, j))],
        out_specs=(pl.BlockSpec((8, 128), lambda i, j: (i, 0)),   # resident over j
                   pl.BlockSpec((8, 128), lambda i, j: (i, 0))),
        compiler_params=pltpu.CompilerParams(
            dimension_semantics=("parallel", "arbitrary")),
    )(x2)

    # Tiny epilogue: every element of a partial block equals that row block's
    # total, so take one element per block and pairwise-sum the partials.
    s = jnp.sum(psum.reshape(grid_r, 8, 128)[:, 0, 0])
    ss = jnp.sum(psq.reshape(grid_r, 8, 128)[:, 0, 0])
    denom = max(n - 1, 1)                       # torch.std() is unbiased (N-1)
    var = jnp.maximum(ss - s * s / n, 0.0) / denom
    noise_level = (jnp.sqrt(var) * std_noise).astype(jnp.float32).reshape(1, 1)

    # Channel noise per (N*C) row; padded so the in-kernel pl.ds slice never
    # leaves the array on a ragged last row block.  Tiny (<= a few KiB).
    cn_rows = jnp.tile(channel_noise_vec.astype(jnp.float32), (N,)).reshape(rows, 1)
    rows_pad = grid_r * tile_r
    if rows_pad != rows:
        cn_rows = jnp.pad(cn_rows, ((0, rows_pad - rows), (0, 0)))

    # ---- Pass 2: tiled elementwise apply (native dtype read + write only) ----
    # TODO(synk): add input_output_aliases={0: 0} once callers donate x; without
    # donation XLA would insert a full-tensor copy that defeats the aliasing.
    out2 = pl.pallas_call(
        functools.partial(_apply_kernel, tile_r=tile_r),
        out_shape=jax.ShapeDtypeStruct((rows, cols), x.dtype),
        grid=(grid_r, grid_c),
        in_specs=[
            pl.BlockSpec((tile_r, tile_c), lambda i, j: (i, j)),
            pl.BlockSpec(memory_space=pltpu.MemorySpace.VMEM),  # cn, whole array
            pl.BlockSpec(memory_space=pltpu.MemorySpace.SMEM),  # noise_level
        ],
        out_specs=pl.BlockSpec((tile_r, tile_c), lambda i, j: (i, j)),
        compiler_params=pltpu.CompilerParams(
            dimension_semantics=("parallel", "parallel")),
    )(x2, cn_rows, noise_level)

    return out2.reshape(N, C, H, W)


def channel_noise_ref(x, channel_noise_vec, std_noise=0.1):
    """Pure-JAX reference mirroring the PyTorch forward (f32 math)."""
    n = x.size
    mean = jnp.mean(x)
    var = jnp.sum((x - mean) ** 2) / (n - 1)    # unbiased, like torch.std()
    noise_level = jnp.sqrt(var) * std_noise
    return x + channel_noise_vec.reshape(1, -1, 1, 1) * noise_level


if __name__ == "__main__":
    key = jax.random.PRNGKey(0)
    kx, kn = jax.random.split(key)

    # Main check: f32, shapes implied by the module (N, C, H, W).
    N, C, H, W = 2, 4, 16, 16
    x = jax.random.normal(kx, (N, C, H, W), dtype=jnp.float32)
    cn = jax.random.uniform(kn, (C,), dtype=jnp.float32)     # torch.rand(C)

    out = jax.block_until_ready(channel_noise(x, cn, std_noise=0.1))
    ref = channel_noise_ref(x, cn, std_noise=0.1)
    assert out.shape == (N, C, H, W) and out.dtype == x.dtype
    assert jnp.allclose(out, ref, atol=1e-5, rtol=1e-5), "f32 mismatch"

    # Native-dtype path: bf16 in / bf16 out, f32 math only inside the kernels.
    xb = x.astype(jnp.bfloat16)
    outb = jax.block_until_ready(channel_noise(xb, cn, std_noise=0.1))
    refb = channel_noise_ref(xb.astype(jnp.float32), cn, std_noise=0.1)
    assert outb.dtype == jnp.bfloat16
    assert jnp.allclose(outb.astype(jnp.float32), refb, atol=5e-2, rtol=5e-2), \
        "bf16 mismatch"

    # Multi-block paths with a tiny forced budget: ragged row tiling ...
    k2, k3 = jax.random.split(kx)
    xr = jax.random.normal(k2, (2, 5, 16, 16), dtype=jnp.float32)
    cnr = jax.random.uniform(k3, (5,), dtype=jnp.float32)
    outr = jax.block_until_ready(
        channel_noise(xr, cnr, std_noise=0.1, target_block_bytes=8192))
    assert jnp.allclose(outr, channel_noise_ref(xr, cnr, std_noise=0.1),
                        atol=1e-5, rtol=1e-5), "ragged-row mismatch"

    # ... and thin-tall tensors (lane-axis tiling + ragged last column block).
    xc = jax.random.normal(k3, (1, 2, 24, 40), dtype=jnp.float32)
    cnc = jax.random.uniform(k2, (2,), dtype=jnp.float32)
    outc = jax.block_until_ready(
        channel_noise(xc, cnc, std_noise=0.1, target_block_bytes=4096))
    assert jnp.allclose(outc, channel_noise_ref(xc, cnc, std_noise=0.1),
                        atol=1e-5, rtol=1e-5), "ragged-col mismatch"

    print("KERNEL_OK")
</pallas_src>

<mosaic_0001>
module attributes {stable_mosaic.version = 11 : i64} {
  func.func @_stats_kernel(%arg0: i32, %arg1: i32, %arg2: memref<8x256xf32, #tpu.memory_space<vmem>>, %arg3: memref<8x128xf32, #tpu.memory_space<vmem>>, %arg4: memref<8x128xf32, #tpu.memory_space<vmem>>) attributes {dimension_semantics = [#tpu.dimension_semantics<parallel>, #tpu.dimension_semantics<arbitrary>], iteration_bounds = array<i64: 1, 1>, scalar_prefetch = 0 : i64, scratch_operands = 0 : i64, tpu.core_type = #tpu.core_type<tc>, window_params = [{transform_indices = @transform_0, window_bounds = array<i64: 8, 256>}, {transform_indices = @transform_1, window_bounds = array<i64: 8, 128>}, {transform_indices = @transform_2, window_bounds = array<i64: 8, 128>}]} {
    %c0_i32 = arith.constant 0 : i32
    %0 = arith.cmpi eq, %arg1, %c0_i32 : i32
    %1 = arith.extui %0 : i1 to i32
    %c0_i32_0 = arith.constant 0 : i32
    %2 = arith.cmpi ne, %1, %c0_i32_0 : i32
    scf.if %2 {
      %cst_11 = arith.constant 0.000000e+00 : f32
      %23 = vector.broadcast %cst_11 : f32 to vector<8x128xf32>
      %c0_12 = arith.constant 0 : index
      %c0_13 = arith.constant 0 : index
      %24 = vector.load %arg3[%c0_12, %c0_13] : memref<8x128xf32, #tpu.memory_space<vmem>>, vector<8x128xf32>
      tpu.vector_store %arg3[%c0_12, %c0_13], %23 {strides = array<i32>} : memref<8x128xf32, #tpu.memory_space<vmem>>, vector<8x128xf32>,
      %cst_14 = arith.constant 0.000000e+00 : f32
      %25 = vector.broadcast %cst_14 : f32 to vector<8x128xf32>
      %c0_15 = arith.constant 0 : index
      %c0_16 = arith.constant 0 : index
      %26 = vector.load %arg4[%c0_15, %c0_16] : memref<8x128xf32, #tpu.memory_space<vmem>>, vector<8x128xf32>
      tpu.vector_store %arg4[%c0_15, %c0_16], %25 {strides = array<i32>} : memref<8x128xf32, #tpu.memory_space<vmem>>, vector<8x128xf32>,
    } else {
    }
    %c0 = arith.constant 0 : index
    %c0_1 = arith.constant 0 : index
    %3 = vector.load %arg2[%c0, %c0_1] : memref<8x256xf32, #tpu.memory_space<vmem>>, vector<8x256xf32>
    %c0_2 = arith.constant 0 : index
    %c0_3 = arith.constant 0 : index
    %4 = vector.load %arg3[%c0_2, %c0_3] : memref<8x128xf32, #tpu.memory_space<vmem>>, vector<8x128xf32>
    %5 = vector.shape_cast %3 : vector<8x256xf32> to vector<1x8x256xf32>
    %cst = arith.constant dense<0.000000e+00> : vector<1xf32>
    %6 = vector.multi_reduction <add>, %5, %cst [1, 2] : vector<1x8x256xf32> to vector<1xf32>
    %7 = vector.shape_cast %6 : vector<1xf32> to vector<1x1x1xf32>
    %8 = vector.extract %7[0, 0, 0] : f32 from vector<1x1x1xf32>
    %9 = vector.broadcast %8 : f32 to vector<1x1xf32>
    %10 = vector.broadcast %9 : vector<1x1xf32> to vector<8x128xf32>
    %11 = arith.addf %4, %10 : vector<8x128xf32>
    %c0_4 = arith.constant 0 : index
    %c0_5 = arith.constant 0 : index
    %12 = vector.load %arg3[%c0_4, %c0_5] : memref<8x128xf32, #tpu.memory_space<vmem>>, vector<8x128xf32>
    tpu.vector_store %arg3[%c0_4, %c0_5], %11 {strides = array<i32>} : memref<8x128xf32, #tpu.memory_space<vmem>>, vector<8x128xf32>,
    %c0_6 = arith.constant 0 : index
    %c0_7 = arith.constant 0 : index
    %13 = vector.load %arg4[%c0_6, %c0_7] : memref<8x128xf32, #tpu.memory_space<vmem>>, vector<8x128xf32>
    %14 = arith.mulf %3, %3 : vector<8x256xf32>
    %15 = vector.shape_cast %14 : vector<8x256xf32> to vector<1x8x256xf32>
    %cst_8 = arith.constant dense<0.000000e+00> : vector<1xf32>
    %16 = vector.multi_reduction <add>, %15, %cst_8 [1, 2] : vector<1x8x256xf32> to vector<1xf32>
    %17 = vector.shape_cast %16 : vector<1xf32> to vector<1x1x1xf32>
    %18 = vector.extract %17[0, 0, 0] : f32 from vector<1x1x1xf32>
    %19 = vector.broadcast %18 : f32 to vector<1x1xf32>
    %20 = vector.broadcast %19 : vector<1x1xf32> to vector<8x128xf32>
    %21 = arith.addf %13, %20 : vector<8x128xf32>
    %c0_9 = arith.constant 0 : index
    %c0_10 = arith.constant 0 : index
    %22 = vector.load %arg4[%c0_9, %c0_10] : memref<8x128xf32, #tpu.memory_space<vmem>>, vector<8x128xf32>
    tpu.vector_store %arg4[%c0_9, %c0_10], %21 {strides = array<i32>} : memref<8x128xf32, #tpu.memory_space<vmem>>, vector<8x128xf32>,
    return
  }
  func.func @transform_0(%arg0: i32, %arg1: i32) -> (i32, i32) {
    %c0_i32 = arith.constant 0 : i32
    return %arg0, %arg1 : i32, i32
  }
  func.func @transform_1(%arg0: i32, %arg1: i32) -> (i32, i32) {
    %c0_i32 = arith.constant 0 : i32
    %c0_i32_0 = arith.constant 0 : i32
    return %arg0, %c0_i32 : i32, i32
  }
  func.func @transform_2(%arg0: i32, %arg1: i32) -> (i32, i32) {
    %c0_i32 = arith.constant 0 : i32
    %c0_i32_0 = arith.constant 0 : i32
    return %arg0, %c0_i32 : i32, i32
  }
}

</mosaic_0001>

<llo_original>
// kernel: tpu_custom_call.1
$region0: #{tpu_custom_call.1}
  #allocation0 [shape = 'u32[]', space=smem, size = 0x4, offset = 0x4, fixed_abs, tag = 'smem constant byte address 0x4 - core index']
  #allocation1 [shape = 'u32[144,128]{1,0:T(1,128)}', space=vmem, size = 0x12000, scoped, tag = 'internal scratch']
  %s0 = inlined_call_operand.hbm [shape: f32[8,256], index: 0, kind: input, shape index: {}]
  %s1 = inlined_call_operand.hbm [shape: f32[8,128], index: 1, kind: output, shape index: {0}]
  %s2 = inlined_call_operand.hbm [shape: f32[8,128], index: 2, kind: output, shape index: {1}]
  %3 = xla_tuple %s1, %s2
  %s4 = sld [smem:[#allocation0]]
  $region30: #{tpu_custom_call.1} parent=0
    _
  %s6 = ssub.s32 1, %s4
  %s7 = scalar_select 0, %s6, %s4
  $region1: #{tpu_custom_call.1} parent=0
    #allocation2 [shape = 'u8[8192]{0}', space=vmem, size = 0x2000, scoped, tag = 'input window, operand 0, single buffered']
    #allocation3 [shape = 's32[1]{0}', space=sflag, size = 0x4, scoped, tag = 'scoped memory for tpu_custom_call.1']
    #allocation4 [shape = 's32[1]{0}', space=sflag, size = 0x4, scoped, tag = 'scoped memory for tpu_custom_call.1']
    #allocation5 [shape = 'u8[4096]{0}', space=vmem, size = 0x1000, scoped, tag = 'output window, operand 0, single buffered']
    #allocation6 [shape = 'u8[4096]{0}', space=vmem, size = 0x1000, scoped, tag = 'output window, operand 1, single buffered']
    #allocation7 [shape = 's32[1]{0}', space=sflag, size = 0x4, scoped, tag = 'scoped memory for tpu_custom_call.1']
    %8 = vsyncpa [#allocation3], 0
    %9 = vsyncpa [#allocation4], 0
    %10 = vsyncpa [#allocation7], 0
    // Predicated region
    $region2: #{tpu_custom_call.1} parent=1 // pred_check
      _
    $region3: #{tpu_custom_call.1} parent=1 // pred_check_branch
      %12 = sbr.rel (0) target = $region5
    $region4: #{tpu_custom_call.1} parent=1 // pred_region
      %s14 = ssub.s32 256, 256
      %15 = vsyncadd [#allocation3], %s14
      %s17 = sshll.u32 [#allocation2], 4
      %s18 = int_to_ptr.vmem [resolvable:$true] %s17
      %20 = dma.hbm_to_vmem [thread:$0]  %s0, 256, %s18, [#allocation3]
    $region5: #{tpu_custom_call.1} parent=1 // pred_fallthru
      _
    // Predicated region
    $region6: #{tpu_custom_call.1} parent=1 // pred_check
      _
    $region7: #{tpu_custom_call.1} parent=1 // pred_check_branch
      %22 = sbr.rel (0) target = $region9
    $region8: #{tpu_custom_call.1} parent=1 // pred_region
      %23 = dma.done [#allocation3], 256
    $region9: #{tpu_custom_call.1} parent=1 // pred_fallthru
      _
    %p24 = scmp.eq.s32.totalorder 0, 0
    // Predicated region
    $region10: #{tpu_custom_call.1} parent=1 // pred_check
      %p25 = pneg %p24
    $region11: #{tpu_custom_call.1} parent=1 // pred_check_branch
      %27 = sbr.rel (%p25) target = $region13
    $region12: #{tpu_custom_call.1} parent=1 // pred_region
      %28 = vst [vmem:[#allocation5] sm:$0xff] 0.0
      %29 = vst [vmem:[#allocation6] sm:$0xff] 0.0
    $region13: #{tpu_custom_call.1} parent=1 // pred_fallthru
      _
    %v30 = vld [vmem:[#allocation2] sm:$0xff]
    %v31 = vld [vmem:[#allocation2 + $0x8] sm:$0xff]
    %v32 = vld [vmem:[#allocation5] sm:$0xff]
    %v33 = vadd.f32 %v30, %v31
    %34 = vadd.xlane.f32.xlu0 %v33
    %v35 = vpop.xlane.xlu0 %34
    %v36 = vrot.slane %v35, 4
    %v37 = vadd.f32 %v35, %v36
    %v38 = vrot.slane %v37, 2
    %v39 = vadd.f32 %v37, %v38
    %v40 = vrot.slane %v39, 1
    %v41 = vadd.f32 %v39, %v40
    %s42 = vtos %v41
    %v43 = vstv %s42
    %v44 = vadd.f32 %v32, %v43
    %45 = vst [vmem:[#allocation5] sm:$0xff] %v44
    %v46 = vld [vmem:[#allocation6] sm:$0xff]
    %v47 = vmul.f32 %v30, %v30
    %v48 = vmul.f32 %v31, %v31
    %v49 = vadd.f32 %v47, %v48
    %50 = vadd.xlane.f32.xlu0 %v49
    %v51 = vpop.xlane.xlu0 %50
    %v52 = vrot.slane %v51, 4
    %v53 = vadd.f32 %v51, %v52
    %v54 = vrot.slane %v53, 2
    %v55 = vadd.f32 %v53, %v54
    %v56 = vrot.slane %v55, 1
    %v57 = vadd.f32 %v55, %v56
    %s58 = vtos %v57
    %v59 = vstv %s58
    %v60 = vadd.f32 %v46, %v59
    %61 = vst [vmem:[#allocation6] sm:$0xff] %v60
    // Predicated region
    $region14: #{tpu_custom_call.1} parent=1 // pred_check
      _
    $region15: #{tpu_custom_call.1} parent=1 // pred_check_branch
      %63 = sbr.rel (0) target = $region17
    $region16: #{tpu_custom_call.1} parent=1 // pred_region
      %s65 = ssub.s32 128, 128
      %66 = vsyncadd [#allocation4], %s65
      %s68 = sshll.u32 [#allocation5], 4
      %s69 = int_to_ptr.vmem [resolvable:$true] %s68
      %71 = dma.vmem_to_hbm [thread:$0]  %s69, 128, %s1, [#allocation4]
    $region17: #{tpu_custom_call.1} parent=1 // pred_fallthru
      _
    // Predicated region
    $region18: #{tpu_custom_call.1} parent=1 // pred_check
      _
    $region19: #{tpu_custom_call.1} parent=1 // pred_check_branch
      %73 = sbr.rel (0) target = $region21
    $region20: #{tpu_custom_call.1} parent=1 // pred_region
      %s75 = ssub.s32 128, 128
      %76 = vsyncadd [#allocation7], %s75
      %s78 = sshll.u32 [#allocation6], 4
      %s79 = int_to_ptr.vmem [resolvable:$true] %s78
      %81 = dma.vmem_to_hbm [thread:$0]  %s79, 128, %s2, [#allocation7]
    $region21: #{tpu_custom_call.1} parent=1 // pred_fallthru
      _
    // Predicated region
    $region22: #{tpu_custom_call.1} parent=1 // pred_check
      _
    $region23: #{tpu_custom_call.1} parent=1 // pred_check_branch
      %83 = sbr.rel (0) target = $region25
    $region24: #{tpu_custom_call.1} parent=1 // pred_region
      %84 = dma.done [#allocation4], 128
    $region25: #{tpu_custom_call.1} parent=1 // pred_fallthru
      _
    // Predicated region
    $region26: #{tpu_custom_call.1} parent=1 // pred_check
      _
    $region27: #{tpu_custom_call.1} parent=1 // pred_check_branch
      %86 = sbr.rel (0) target = $region29
    $region28: #{tpu_custom_call.1} parent=1 // pred_region
      %87 = dma.done [#allocation7], 128
    $region29: #{tpu_custom_call.1} parent=1 // pred_fallthru
      _
    %88 = vsyncpa [#allocation3], 1
    %89 = vsyncpa [#allocation4], 1
    %90 = vsyncpa [#allocation7], 1

</llo_original>
